<compile_context>
chip_gen: v5e
topology: v5e:2x2
jax: 0.10.0
libtpu: 0.0.40
codegen_flags: <defaults>
</compile_context>

<pallas_src>
import functools
import math

import jax
import jax.numpy as jnp
from jax.experimental import pallas as pl
from jax.experimental.pallas import tpu as pltpu


def _layernorm(y, gamma, beta, eps=1e-5):
    mu = jnp.mean(y, axis=-1, keepdims=True)
    var = jnp.mean((y - mu) ** 2, axis=-1, keepdims=True)
    return (y - mu) * jax.lax.rsqrt(var + eps) * gamma + beta


def ffn_trans_kernel(
    x_ref,        # (Bt, S, E)
    wqkv_ref,     # (E, 3*HD)   fused Q|K|V weight
    bqkv_ref,     # (1, 3*HD)   fused Q|K|V bias
    wo_ref,       # (HD, E)
    w1_ref,       # (E, F)
    b1_ref,       # (1, F)
    w2_ref,       # (F, E)
    vec_ref,      # (6, E): rows = [bo, g1, be1, b2, g2, be2]
    o_ref,        # (Bt, S, E)
    attn_sc,      # VMEM scratch (Bt*S, HD) f32
    *, num_heads, head_dim,
):
    Bt, S, E = x_ref.shape
    D = head_dim
    HD = num_heads * D
    N = Bt * S

    # Flatten the batch tile to dense rows for all row-wise matmuls.
    x = x_ref[...].reshape(N, E)

    # --- fused Q/K/V projection: one MXU pass, 3x wider N ---
    qkv = jnp.dot(x, wqkv_ref[...], preferred_element_type=jnp.float32) + bqkv_ref[...]

    # Fold 1/sqrt(D) into q (cheaper than scaling the S x S score matrix).
    q = qkv[:, 0 * HD:1 * HD] * (1.0 / math.sqrt(D))
    k = qkv[:, 1 * HD:2 * HD]
    v = qkv[:, 2 * HD:3 * HD]

    row = jax.lax.broadcasted_iota(jnp.int32, (S, S), 0)
    col = jax.lax.broadcasted_iota(jnp.int32, (S, S), 1)
    causal = row >= col  # diagonal always unmasked -> softmax rows never all -inf

    # --- per-head attention, batched over the batch dim; no k.T, no concat ---
    for h in range(num_heads):
        qh = q[:, h * D:(h + 1) * D].reshape(Bt, S, D)
        kh = k[:, h * D:(h + 1) * D].reshape(Bt, S, D)
        vh = v[:, h * D:(h + 1) * D].reshape(Bt, S, D)
        s = jnp.einsum("bqd,bkd->bqk", qh, kh,
                       preferred_element_type=jnp.float32)
        s = jnp.where(causal, s, -jnp.inf)
        s = s - jnp.max(s, axis=-1, keepdims=True)
        p = jnp.exp(s)
        p = p * pl.reciprocal(jnp.sum(p, axis=-1, keepdims=True), approx=True)
        oh = jnp.einsum("bqk,bkd->bqd", p, vh,
                        preferred_element_type=jnp.float32)
        # Write directly into the per-head lane slice of the scratch accumulator.
        attn_sc[:, h * D:(h + 1) * D] = oh.reshape(N, D)

    bo = vec_ref[0:1, :]
    g1 = vec_ref[1:2, :]
    be1 = vec_ref[2:3, :]
    b2 = vec_ref[3:4, :]
    g2 = vec_ref[4:5, :]
    be2 = vec_ref[5:6, :]

    # Output projection over the full (N, HD) accumulator (single K=HD matmul).
    attn = jnp.dot(attn_sc[...], wo_ref[...],
                   preferred_element_type=jnp.float32) + bo

    # --- residual + LayerNorm 1 (dropout = identity) ---
    x1 = _layernorm(x + attn, g1, be1)

    # --- feed-forward ---
    h1 = jnp.dot(x1, w1_ref[...], preferred_element_type=jnp.float32) + b1_ref[...]
    h1 = jnp.maximum(h1, 0.0)
    fc = jnp.dot(h1, w2_ref[...], preferred_element_type=jnp.float32) + b2

    # --- residual + LayerNorm 2 (dropout = identity) ---
    x2 = _layernorm(x1 + fc, g2, be2)

    o_ref[...] = x2.reshape(Bt, S, E).astype(o_ref.dtype)


def _pick_batch_tile(batch, seq, target_rows=256):
    """Largest divisor of `batch` keeping the flattened row count modest."""
    best = 1
    for cand in range(1, batch + 1):
        if batch % cand == 0 and cand * seq <= max(target_rows, seq):
            best = cand
    return best


def ffn_trans_layer(x, params, *, num_heads, head_dim, batch_tile=None):
    B, S, E = x.shape
    HD = num_heads * head_dim

    bt = batch_tile if batch_tile is not None else _pick_batch_tile(B, S)
    assert B % bt == 0, "batch tile must divide batch"

    # Fuse QKV weights/biases wrapper-side; pack the six (1, E) vectors into one
    # (6, E) array (fewer tiny VMEM buffers / DMA descriptors per pipeline setup).
    wqkv = jnp.concatenate([params["wq"], params["wk"], params["wv"]], axis=1)
    bqkv = jnp.concatenate([params["bq"], params["bk"], params["bv"]], axis=1)
    vec_e = jnp.concatenate(
        [params["bo"], params["g1"], params["be1"],
         params["b2"], params["g2"], params["be2"]], axis=0)

    plist = [wqkv, bqkv, params["wo"], params["w1"], params["b1"],
             params["w2"], vec_e]

    def full_spec(arr):
        nd = arr.ndim
        return pl.BlockSpec(arr.shape, lambda i, _nd=nd: (0,) * _nd)

    kernel = functools.partial(
        ffn_trans_kernel, num_heads=num_heads, head_dim=head_dim)

    return pl.pallas_call(
        kernel,
        out_shape=jax.ShapeDtypeStruct((B, S, E), x.dtype),
        grid_spec=pltpu.PrefetchScalarGridSpec(
            num_scalar_prefetch=0,
            grid=(B // bt,),
            in_specs=[pl.BlockSpec((bt, S, E), lambda i: (i, 0, 0))]
            + [full_spec(p) for p in plist],
            out_specs=pl.BlockSpec((bt, S, E), lambda i: (i, 0, 0)),
            scratch_shapes=[pltpu.VMEM((bt * S, HD), jnp.float32)],
        ),
        compiler_params=pltpu.CompilerParams(
            dimension_semantics=("parallel",)),
    )(x, *plist)


def reference(x, params, *, num_heads, head_dim):
    """Pure-JAX reference mirroring the PyTorch forward (eval mode)."""
    B, S, E = x.shape
    D = head_dim

    def ln(y, g, b):
        mu = jnp.mean(y, axis=-1, keepdims=True)
        var = jnp.mean((y - mu) ** 2, axis=-1, keepdims=True)
        return (y - mu) / jnp.sqrt(var + 1e-5) * g + b

    q = x @ params["wq"] + params["bq"]
    k = x @ params["wk"] + params["bk"]
    v = x @ params["wv"] + params["bv"]
    q = q.reshape(B, S, num_heads, D).transpose(0, 2, 1, 3)
    k = k.reshape(B, S, num_heads, D).transpose(0, 2, 1, 3)
    v = v.reshape(B, S, num_heads, D).transpose(0, 2, 1, 3)
    s = jnp.einsum("bhqd,bhkd->bhqk", q, k) / math.sqrt(D)
    mask = jnp.tril(jnp.ones((S, S)))
    s = jnp.where(mask == 0, -jnp.inf, s)
    p = jax.nn.softmax(s, axis=-1)
    attn = jnp.einsum("bhqk,bhkd->bhqd", p, v)
    attn = attn.transpose(0, 2, 1, 3).reshape(B, S, num_heads * D)
    attn = attn @ params["wo"] + params["bo"]
    x1 = ln(x + attn, params["g1"], params["be1"])
    h = jnp.maximum(x1 @ params["w1"] + params["b1"], 0.0)
    fc = h @ params["w2"] + params["b2"]
    return ln(x1 + fc, params["g2"], params["be2"])


if __name__ == "__main__":
    B, S = 2, 8
    embed_dim, ffn_dim = 32, 64
    num_heads, head_dim = 4, 8
    HD = num_heads * head_dim

    key = jax.random.PRNGKey(0)
    keys = jax.random.split(key, 16)

    def init_w(k, shape, fan_in):
        bound = 1.0 / math.sqrt(fan_in)
        return jax.random.uniform(k, shape, jnp.float32, -bound, bound)

    params = {
        # Linear weights stored as (in, out) = PyTorch weight.T
        "wq": init_w(keys[0], (embed_dim, HD), embed_dim),
        "bq": init_w(keys[1], (1, HD), embed_dim),
        "wk": init_w(keys[2], (embed_dim, HD), embed_dim),
        "bk": init_w(keys[3], (1, HD), embed_dim),
        "wv": init_w(keys[4], (embed_dim, HD), embed_dim),
        "bv": init_w(keys[5], (1, HD), embed_dim),
        "wo": init_w(keys[6], (HD, embed_dim), HD),
        "bo": init_w(keys[7], (1, embed_dim), HD),
        "g1": jnp.ones((1, embed_dim), jnp.float32),
        "be1": jnp.zeros((1, embed_dim), jnp.float32),
        "w1": init_w(keys[8], (embed_dim, ffn_dim), embed_dim),
        "b1": init_w(keys[9], (1, ffn_dim), embed_dim),
        "w2": init_w(keys[10], (ffn_dim, embed_dim), ffn_dim),
        "b2": init_w(keys[11], (1, embed_dim), ffn_dim),
        "g2": jnp.ones((1, embed_dim), jnp.float32),
        "be2": jnp.zeros((1, embed_dim), jnp.float32),
    }

    x = jax.random.normal(keys[12], (B, S, embed_dim), jnp.float32)

    out = ffn_trans_layer(x, params, num_heads=num_heads, head_dim=head_dim)
    out = jax.block_until_ready(out)

    ref = reference(x, params, num_heads=num_heads, head_dim=head_dim)
    assert out.shape == (B, S, embed_dim)
    # Tolerance accounts for the EUP approximate-reciprocal softmax normalization.
    assert jnp.allclose(out, ref, atol=1e-2, rtol=1e-2), "mismatch vs reference"

    print("KERNEL_OK")
</pallas_src>

<mosaic_0001>
module attributes {stable_mosaic.version = 11 : i64} {
  func.func @ffn_trans_kernel(%arg0: i32, %arg1: memref<2x8x32xf32, #tpu.memory_space<vmem>>, %arg2: memref<32x96xf32, #tpu.memory_space<vmem>>, %arg3: memref<1x96xf32, #tpu.memory_space<vmem>>, %arg4: memref<32x32xf32, #tpu.memory_space<vmem>>, %arg5: memref<32x64xf32, #tpu.memory_space<vmem>>, %arg6: memref<1x64xf32, #tpu.memory_space<vmem>>, %arg7: memref<64x32xf32, #tpu.memory_space<vmem>>, %arg8: memref<6x32xf32, #tpu.memory_space<vmem>>, %arg9: memref<2x8x32xf32, #tpu.memory_space<vmem>>, %arg10: memref<16x32xf32, #tpu.memory_space<vmem>>) attributes {dimension_semantics = [#tpu.dimension_semantics<parallel>], iteration_bounds = array<i64: 1>, scalar_prefetch = 0 : i64, scratch_operands = 1 : i64, tpu.core_type = #tpu.core_type<tc>, window_params = [{transform_indices = @transform_0, window_bounds = array<i64: 2, 8, 32>}, {pipeline_mode = #tpu.pipeline_mode<synchronous>, transform_indices = @transform_1, window_bounds = array<i64: 32, 96>}, {pipeline_mode = #tpu.pipeline_mode<synchronous>, transform_indices = @transform_2, window_bounds = array<i64: 1, 96>}, {pipeline_mode = #tpu.pipeline_mode<synchronous>, transform_indices = @transform_3, window_bounds = array<i64: 32, 32>}, {pipeline_mode = #tpu.pipeline_mode<synchronous>, transform_indices = @transform_4, window_bounds = array<i64: 32, 64>}, {pipeline_mode = #tpu.pipeline_mode<synchronous>, transform_indices = @transform_5, window_bounds = array<i64: 1, 64>}, {pipeline_mode = #tpu.pipeline_mode<synchronous>, transform_indices = @transform_6, window_bounds = array<i64: 64, 32>}, {pipeline_mode = #tpu.pipeline_mode<synchronous>, transform_indices = @transform_7, window_bounds = array<i64: 6, 32>}, {transform_indices = @transform_8, window_bounds = array<i64: 2, 8, 32>}]} {
    %c0 = arith.constant 0 : index
    %c0_0 = arith.constant 0 : index
    %c0_1 = arith.constant 0 : index
    %0 = vector.load %arg1[%c0, %c0_0, %c0_1] : memref<2x8x32xf32, #tpu.memory_space<vmem>>, vector<2x8x32xf32>
    %1 = vector.shape_cast %0 : vector<2x8x32xf32> to vector<16x32xf32>
    %c0_2 = arith.constant 0 : index
    %c0_3 = arith.constant 0 : index
    %2 = vector.load %arg2[%c0_2, %c0_3] : memref<32x96xf32, #tpu.memory_space<vmem>>, vector<32x96xf32>
    %cst = arith.constant dense<0.000000e+00> : vector<16x96xf32>
    %3 = tpu.matmul %1, %2, %cst {dimension_numbers = #tpu.dot_dimension_numbers<[1], [0], [0], [1], [0, 0, 1, 1], [], []>} : vector<16x32xf32>, vector<32x96xf32>, vector<16x96xf32> -> vector<16x96xf32>
    %c0_4 = arith.constant 0 : index
    %c0_5 = arith.constant 0 : index
    %4 = vector.load %arg3[%c0_4, %c0_5] : memref<1x96xf32, #tpu.memory_space<vmem>>, vector<1x96xf32>
    %5 = vector.broadcast %4 : vector<1x96xf32> to vector<16x96xf32>
    %6 = arith.addf %3, %5 : vector<16x96xf32>
    %7 = vector.extract_strided_slice %6 {offsets = [0, 0], sizes = [16, 32], strides = [1, 1]} : vector<16x96xf32> to vector<16x32xf32>
    %cst_6 = arith.constant 0.353553385 : f32
    %8 = vector.broadcast %cst_6 : f32 to vector<16x32xf32>
    %9 = arith.mulf %7, %8 : vector<16x32xf32>
    %10 = vector.extract_strided_slice %6 {offsets = [0, 32], sizes = [16, 32], strides = [1, 1]} : vector<16x96xf32> to vector<16x32xf32>
    %11 = vector.extract_strided_slice %6 {offsets = [0, 64], sizes = [16, 32], strides = [1, 1]} : vector<16x96xf32> to vector<16x32xf32>
    %12 = tpu.iota {dimensions = array<i32: 0>} : vector<8x8xi32>
    %13 = tpu.iota {dimensions = array<i32: 1>} : vector<8x8xi32>
    %14 = arith.cmpi sge, %12, %13 : vector<8x8xi32>
    %15 = vector.extract_strided_slice %9 {offsets = [0, 0], sizes = [16, 8], strides = [1, 1]} : vector<16x32xf32> to vector<16x8xf32>
    %16 = vector.shape_cast %15 : vector<16x8xf32> to vector<2x8x8xf32>
    %17 = vector.extract_strided_slice %10 {offsets = [0, 0], sizes = [16, 8], strides = [1, 1]} : vector<16x32xf32> to vector<16x8xf32>
    %18 = vector.shape_cast %17 : vector<16x8xf32> to vector<2x8x8xf32>
    %19 = vector.extract_strided_slice %11 {offsets = [0, 0], sizes = [16, 8], strides = [1, 1]} : vector<16x32xf32> to vector<16x8xf32>
    %20 = vector.shape_cast %19 : vector<16x8xf32> to vector<2x8x8xf32>
    "tpu.trace_start"() <{level = 10 : i32, message = "bqd,bkd->bqk"}> : () -> ()
    %cst_7 = arith.constant dense<0.000000e+00> : vector<2x8x8xf32>
    %21 = tpu.matmul %16, %18, %cst_7 {dimension_numbers = #tpu.dot_dimension_numbers<[2], [2], [1], [1], [0, 0, 0, 1, 1, 1], [0], [0]>} : vector<2x8x8xf32>, vector<2x8x8xf32>, vector<2x8x8xf32> -> vector<2x8x8xf32>
    %cst_8 = arith.constant 0xFF800000 : f32
    "tpu.trace_stop"() : () -> ()
    %22 = vector.shape_cast %14 : vector<8x8xi1> to vector<1x8x8xi1>
    %23 = vector.broadcast %22 : vector<1x8x8xi1> to vector<2x8x8xi1>
    %24 = vector.broadcast %cst_8 : f32 to vector<2x8x8xf32>
    %25 = arith.select %23, %21, %24 : vector<2x8x8xi1>, vector<2x8x8xf32>
    %cst_9 = arith.constant dense<0xFF800000> : vector<2x8xf32>
    %26 = vector.multi_reduction <maximumf>, %25, %cst_9 [2] : vector<2x8x8xf32> to vector<2x8xf32>
    %27 = vector.shape_cast %26 : vector<2x8xf32> to vector<2x8x1xf32>
    %28 = vector.broadcast %27 : vector<2x8x1xf32> to vector<2x8x8xf32>
    %29 = arith.subf %25, %28 : vector<2x8x8xf32>
    %30 = math.exp %29 : vector<2x8x8xf32>
    %cst_10 = arith.constant dense<0.000000e+00> : vector<2x8xf32>
    %31 = vector.multi_reduction <add>, %30, %cst_10 [2] : vector<2x8x8xf32> to vector<2x8xf32>
    %32 = vector.shape_cast %31 : vector<2x8xf32> to vector<2x8x1xf32>
    %33 = tpu.reciprocal %32 {approx = true} : vector<2x8x1xf32> -> vector<2x8x1xf32>
    %34 = vector.broadcast %33 : vector<2x8x1xf32> to vector<2x8x8xf32>
    %35 = arith.mulf %30, %34 : vector<2x8x8xf32>
    "tpu.trace_start"() <{level = 10 : i32, message = "bqk,bkd->bqd"}> : () -> ()
    %cst_11 = arith.constant dense<0.000000e+00> : vector<2x8x8xf32>
    %36 = tpu.matmul %35, %20, %cst_11 {dimension_numbers = #tpu.dot_dimension_numbers<[2], [1], [1], [2], [0, 0, 0, 1, 1, 2], [0], [0]>} : vector<2x8x8xf32>, vector<2x8x8xf32>, vector<2x8x8xf32> -> vector<2x8x8xf32>
    "tpu.trace_stop"() : () -> ()
    %37 = vector.shape_cast %36 : vector<2x8x8xf32> to vector<16x8xf32>
    %c0_12 = arith.constant 0 : index
    %c0_13 = arith.constant 0 : index
    %38 = vector.load %arg10[%c0_12, %c0_13] : memref<16x32xf32, #tpu.memory_space<vmem>>, vector<16x8xf32>
    tpu.vector_store %arg10[%c0_12, %c0_13], %37 {strides = array<i32>} : memref<16x32xf32, #tpu.memory_space<vmem>>, vector<16x8xf32>,
    %39 = vector.extract_strided_slice %9 {offsets = [0, 8], sizes = [16, 8], strides = [1, 1]} : vector<16x32xf32> to vector<16x8xf32>
    %40 = vector.shape_cast %39 : vector<16x8xf32> to vector<2x8x8xf32>
    %41 = vector.extract_strided_slice %10 {offsets = [0, 8], sizes = [16, 8], strides = [1, 1]} : vector<16x32xf32> to vector<16x8xf32>
    %42 = vector.shape_cast %41 : vector<16x8xf32> to vector<2x8x8xf32>
    %43 = vector.extract_strided_slice %11 {offsets = [0, 8], sizes = [16, 8], strides = [1, 1]} : vector<16x32xf32> to vector<16x8xf32>
    %44 = vector.shape_cast %43 : vector<16x8xf32> to vector<2x8x8xf32>
    "tpu.trace_start"() <{level = 10 : i32, message = "bqd,bkd->bqk"}> : () -> ()
    %cst_14 = arith.constant dense<0.000000e+00> : vector<2x8x8xf32>
    %45 = tpu.matmul %40, %42, %cst_14 {dimension_numbers = #tpu.dot_dimension_numbers<[2], [2], [1], [1], [0, 0, 0, 1, 1, 1], [0], [0]>} : vector<2x8x8xf32>, vector<2x8x8xf32>, vector<2x8x8xf32> -> vector<2x8x8xf32>
    %cst_15 = arith.constant 0xFF800000 : f32
    "tpu.trace_stop"() : () -> ()
    %46 = vector.shape_cast %14 : vector<8x8xi1> to vector<1x8x8xi1>
    %47 = vector.broadcast %46 : vector<1x8x8xi1> to vector<2x8x8xi1>
    %48 = vector.broadcast %cst_15 : f32 to vector<2x8x8xf32>
    %49 = arith.select %47, %45, %48 : vector<2x8x8xi1>, vector<2x8x8xf32>
    %cst_16 = arith.constant dense<0xFF800000> : vector<2x8xf32>
    %50 = vector.multi_reduction <maximumf>, %49, %cst_16 [2] : vector<2x8x8xf32> to vector<2x8xf32>
    %51 = vector.shape_cast %50 : vector<2x8xf32> to vector<2x8x1xf32>
    %52 = vector.broadcast %51 : vector<2x8x1xf32> to vector<2x8x8xf32>
    %53 = arith.subf %49, %52 : vector<2x8x8xf32>
    %54 = math.exp %53 : vector<2x8x8xf32>
    %cst_17 = arith.constant dense<0.000000e+00> : vector<2x8xf32>
    %55 = vector.multi_reduction <add>, %54, %cst_17 [2] : vector<2x8x8xf32> to vector<2x8xf32>
    %56 = vector.shape_cast %55 : vector<2x8xf32> to vector<2x8x1xf32>
    %57 = tpu.reciprocal %56 {approx = true} : vector<2x8x1xf32> -> vector<2x8x1xf32>
    %58 = vector.broadcast %57 : vector<2x8x1xf32> to vector<2x8x8xf32>
    %59 = arith.mulf %54, %58 : vector<2x8x8xf32>
    "tpu.trace_start"() <{level = 10 : i32, message = "bqk,bkd->bqd"}> : () -> ()
    %cst_18 = arith.constant dense<0.000000e+00> : vector<2x8x8xf32>
    %60 = tpu.matmul %59, %44, %cst_18 {dimension_numbers = #tpu.dot_dimension_numbers<[2], [1], [1], [2], [0, 0, 0, 1, 1, 2], [0], [0]>} : vector<2x8x8xf32>, vector<2x8x8xf32>, vector<2x8x8xf32> -> vector<2x8x8xf32>
    "tpu.trace_stop"() : () -> ()
    %61 = vector.shape_cast %60 : vector<2x8x8xf32> to vector<16x8xf32>
    %c0_19 = arith.constant 0 : index
    %c8 = arith.constant 8 : index
    %62 = vector.load %arg10[%c0_19, %c8] : memref<16x32xf32, #tpu.memory_space<vmem>>, vector<16x8xf32>
    tpu.vector_store %arg10[%c0_19, %c8], %61 {strides = array<i32>} : memref<16x32xf32, #tpu.memory_space<vmem>>, vector<16x8xf32>,
    %63 = vector.extract_strided_slice %9 {offsets = [0, 16], sizes = [16, 8], strides = [1, 1]} : vector<16x32xf32> to vector<16x8xf32>
    %64 = vector.shape_cast %63 : vector<16x8xf32> to vector<2x8x8xf32>
    %65 = vector.extract_strided_slice %10 {offsets = [0, 16], sizes = [16, 8], strides = [1, 1]} : vector<16x32xf32> to vector<16x8xf32>
    %66 = vector.shape_cast %65 : vector<16x8xf32> to vector<2x8x8xf32>
    %67 = vector.extract_strided_slice %11 {offsets = [0, 16], sizes = [16, 8], strides = [1, 1]} : vector<16x32xf32> to vector<16x8xf32>
    %68 = vector.shape_cast %67 : vector<16x8xf32> to vector<2x8x8xf32>
    "tpu.trace_start"() <{level = 10 : i32, message = "bqd,bkd->bqk"}> : () -> ()
    %cst_20 = arith.constant dense<0.000000e+00> : vector<2x8x8xf32>
    %69 = tpu.matmul %64, %66, %cst_20 {dimension_numbers = #tpu.dot_dimension_numbers<[2], [2], [1], [1], [0, 0, 0, 1, 1, 1], [0], [0]>} : vector<2x8x8xf32>, vector<2x8x8xf32>, vector<2x8x8xf32> -> vector<2x8x8xf32>
    %cst_21 = arith.constant 0xFF800000 : f32
    "tpu.trace_stop"() : () -> ()
    %70 = vector.shape_cast %14 : vector<8x8xi1> to vector<1x8x8xi1>
    %71 = vector.broadcast %70 : vector<1x8x8xi1> to vector<2x8x8xi1>
    %72 = vector.broadcast %cst_21 : f32 to vector<2x8x8xf32>
    %73 = arith.select %71, %69, %72 : vector<2x8x8xi1>, vector<2x8x8xf32>
    %cst_22 = arith.constant dense<0xFF800000> : vector<2x8xf32>
    %74 = vector.multi_reduction <maximumf>, %73, %cst_22 [2] : vector<2x8x8xf32> to vector<2x8xf32>
    %75 = vector.shape_cast %74 : vector<2x8xf32> to vector<2x8x1xf32>
    %76 = vector.broadcast %75 : vector<2x8x1xf32> to vector<2x8x8xf32>
    %77 = arith.subf %73, %76 : vector<2x8x8xf32>
    %78 = math.exp %77 : vector<2x8x8xf32>
    %cst_23 = arith.constant dense<0.000000e+00> : vector<2x8xf32>
    %79 = vector.multi_reduction <add>, %78, %cst_23 [2] : vector<2x8x8xf32> to vector<2x8xf32>
    %80 = vector.shape_cast %79 : vector<2x8xf32> to vector<2x8x1xf32>
    %81 = tpu.reciprocal %80 {approx = true} : vector<2x8x1xf32> -> vector<2x8x1xf32>
    %82 = vector.broadcast %81 : vector<2x8x1xf32> to vector<2x8x8xf32>
    %83 = arith.mulf %78, %82 : vector<2x8x8xf32>
    "tpu.trace_start"() <{level = 10 : i32, message = "bqk,bkd->bqd"}> : () -> ()
    %cst_24 = arith.constant dense<0.000000e+00> : vector<2x8x8xf32>
    %84 = tpu.matmul %83, %68, %cst_24 {dimension_numbers = #tpu.dot_dimension_numbers<[2], [1], [1], [2], [0, 0, 0, 1, 1, 2], [0], [0]>} : vector<2x8x8xf32>, vector<2x8x8xf32>, vector<2x8x8xf32> -> vector<2x8x8xf32>
    "tpu.trace_stop"() : () -> ()
    %85 = vector.shape_cast %84 : vector<2x8x8xf32> to vector<16x8xf32>
    %c0_25 = arith.constant 0 : index
    %c16 = arith.constant 16 : index
    %86 = vector.load %arg10[%c0_25, %c16] : memref<16x32xf32, #tpu.memory_space<vmem>>, vector<16x8xf32>
    tpu.vector_store %arg10[%c0_25, %c16], %85 {strides = array<i32>} : memref<16x32xf32, #tpu.memory_space<vmem>>, vector<16x8xf32>,
    %87 = vector.extract_strided_slice %9 {offsets = [0, 24], sizes = [16, 8], strides = [1, 1]} : vector<16x32xf32> to vector<16x8xf32>
    %88 = vector.shape_cast %87 : vector<16x8xf32> to vector<2x8x8xf32>
    %89 = vector.extract_strided_slice %10 {offsets = [0, 24], sizes = [16, 8], strides = [1, 1]} : vector<16x32xf32> to vector<16x8xf32>
    %90 = vector.shape_cast %89 : vector<16x8xf32> to vector<2x8x8xf32>
    %91 = vector.extract_strided_slice %11 {offsets = [0, 24], sizes = [16, 8], strides = [1, 1]} : vector<16x32xf32> to vector<16x8xf32>
    %92 = vector.shape_cast %91 : vector<16x8xf32> to vector<2x8x8xf32>
    "tpu.trace_start"() <{level = 10 : i32, message = "bqd,bkd->bqk"}> : () -> ()
    %cst_26 = arith.constant dense<0.000000e+00> : vector<2x8x8xf32>
    %93 = tpu.matmul %88, %90, %cst_26 {dimension_numbers = #tpu.dot_dimension_numbers<[2], [2], [1], [1], [0, 0, 0, 1, 1, 1], [0], [0]>} : vector<2x8x8xf32>, vector<2x8x8xf32>, vector<2x8x8xf32> -> vector<2x8x8xf32>
    %cst_27 = arith.constant 0xFF800000 : f32
    "tpu.trace_stop"() : () -> ()
    %94 = vector.shape_cast %14 : vector<8x8xi1> to vector<1x8x8xi1>
    %95 = vector.broadcast %94 : vector<1x8x8xi1> to vector<2x8x8xi1>
    %96 = vector.broadcast %cst_27 : f32 to vector<2x8x8xf32>
    %97 = arith.select %95, %93, %96 : vector<2x8x8xi1>, vector<2x8x8xf32>
    %cst_28 = arith.constant dense<0xFF800000> : vector<2x8xf32>
    %98 = vector.multi_reduction <maximumf>, %97, %cst_28 [2] : vector<2x8x8xf32> to vector<2x8xf32>
    %99 = vector.shape_cast %98 : vector<2x8xf32> to vector<2x8x1xf32>
    %100 = vector.broadcast %99 : vector<2x8x1xf32> to vector<2x8x8xf32>
    %101 = arith.subf %97, %100 : vector<2x8x8xf32>
    %102 = math.exp %101 : vector<2x8x8xf32>
    %cst_29 = arith.constant dense<0.000000e+00> : vector<2x8xf32>
    %103 = vector.multi_reduction <add>, %102, %cst_29 [2] : vector<2x8x8xf32> to vector<2x8xf32>
    %104 = vector.shape_cast %103 : vector<2x8xf32> to vector<2x8x1xf32>
    %105 = tpu.reciprocal %104 {approx = true} : vector<2x8x1xf32> -> vector<2x8x1xf32>
    %106 = vector.broadcast %105 : vector<2x8x1xf32> to vector<2x8x8xf32>
    %107 = arith.mulf %102, %106 : vector<2x8x8xf32>
    "tpu.trace_start"() <{level = 10 : i32, message = "bqk,bkd->bqd"}> : () -> ()
    %cst_30 = arith.constant dense<0.000000e+00> : vector<2x8x8xf32>
    %108 = tpu.matmul %107, %92, %cst_30 {dimension_numbers = #tpu.dot_dimension_numbers<[2], [1], [1], [2], [0, 0, 0, 1, 1, 2], [0], [0]>} : vector<2x8x8xf32>, vector<2x8x8xf32>, vector<2x8x8xf32> -> vector<2x8x8xf32>
    "tpu.trace_stop"() : () -> ()
    %109 = vector.shape_cast %108 : vector<2x8x8xf32> to vector<16x8xf32>
    %c0_31 = arith.constant 0 : index
    %c24 = arith.constant 24 : index
    %110 = vector.load %arg10[%c0_31, %c24] : memref<16x32xf32, #tpu.memory_space<vmem>>, vector<16x8xf32>
    tpu.vector_store %arg10[%c0_31, %c24], %109 {strides = array<i32>} : memref<16x32xf32, #tpu.memory_space<vmem>>, vector<16x8xf32>,
    %c0_32 = arith.constant 0 : index
    %c0_33 = arith.constant 0 : index
    %111 = vector.load %arg8[%c0_32, %c0_33] : memref<6x32xf32, #tpu.memory_space<vmem>>, vector<1x32xf32>
    %c1 = arith.constant 1 : index
    %c0_34 = arith.constant 0 : index
    %112 = vector.load %arg8[%c1, %c0_34] : memref<6x32xf32, #tpu.memory_space<vmem>>, vector<1x32xf32>
    %c2 = arith.constant 2 : index
    %c0_35 = arith.constant 0 : index
    %113 = vector.load %arg8[%c2, %c0_35] : memref<6x32xf32, #tpu.memory_space<vmem>>, vector<1x32xf32>
    %c3 = arith.constant 3 : index
    %c0_36 = arith.constant 0 : index
    %114 = vector.load %arg8[%c3, %c0_36] : memref<6x32xf32, #tpu.memory_space<vmem>>, vector<1x32xf32>
    %c4 = arith.constant 4 : index
    %c0_37 = arith.constant 0 : index
    %115 = vector.load %arg8[%c4, %c0_37] : memref<6x32xf32, #tpu.memory_space<vmem>>, vector<1x32xf32>
    %c5 = arith.constant 5 : index
    %c0_38 = arith.constant 0 : index
    %116 = vector.load %arg8[%c5, %c0_38] : memref<6x32xf32, #tpu.memory_space<vmem>>, vector<1x32xf32>
    %c0_39 = arith.constant 0 : index
    %c0_40 = arith.constant 0 : index
    %117 = vector.load %arg10[%c0_39, %c0_40] : memref<16x32xf32, #tpu.memory_space<vmem>>, vector<16x32xf32>
    %c0_41 = arith.constant 0 : index
    %c0_42 = arith.constant 0 : index
    %118 = vector.load %arg4[%c0_41, %c0_42] : memref<32x32xf32, #tpu.memory_space<vmem>>, vector<32x32xf32>
    %cst_43 = arith.constant dense<0.000000e+00> : vector<16x32xf32>
    %119 = tpu.matmul %117, %118, %cst_43 {dimension_numbers = #tpu.dot_dimension_numbers<[1], [0], [0], [1], [0, 0, 1, 1], [], []>} : vector<16x32xf32>, vector<32x32xf32>, vector<16x32xf32> -> vector<16x32xf32>
    %120 = vector.broadcast %111 : vector<1x32xf32> to vector<16x32xf32>
    %121 = arith.addf %119, %120 : vector<16x32xf32>
    %122 = arith.addf %1, %121 : vector<16x32xf32>
    %cst_44 = arith.constant dense<0.000000e+00> : vector<16xf32>
    %123 = vector.multi_reduction <add>, %122, %cst_44 [1] : vector<16x32xf32> to vector<16xf32>
    %124 = vector.shape_cast %123 : vector<16xf32> to vector<16x1xf32>
    %cst_45 = arith.constant 3.200000e+01 : f32
    %125 = vector.broadcast %cst_45 : f32 to vector<16x1xf32>
    %126 = arith.divf %124, %125 : vector<16x1xf32>
    %127 = vector.broadcast %126 : vector<16x1xf32> to vector<16x32xf32>
    %128 = arith.subf %122, %127 : vector<16x32xf32>
    %129 = arith.mulf %128, %128 : vector<16x32xf32>
    %cst_46 = arith.constant dense<0.000000e+00> : vector<16xf32>
    %130 = vector.multi_reduction <add>, %129, %cst_46 [1] : vector<16x32xf32> to vector<16xf32>
    %131 = vector.shape_cast %130 : vector<16xf32> to vector<16x1xf32>
    %cst_47 = arith.constant 3.200000e+01 : f32
    %132 = vector.broadcast %cst_47 : f32 to vector<16x1xf32>
    %133 = arith.divf %131, %132 : vector<16x1xf32>
    %134 = vector.broadcast %126 : vector<16x1xf32> to vector<16x32xf32>
    %135 = arith.subf %122, %134 : vector<16x32xf32>
    %cst_48 = arith.constant 9.99999974E-6 : f32
    %136 = vector.broadcast %cst_48 : f32 to vector<16x1xf32>
    %137 = arith.addf %133, %136 : vector<16x1xf32>
    %138 = math.rsqrt %137 : vector<16x1xf32>
    %139 = vector.broadcast %138 : vector<16x1xf32> to vector<16x32xf32>
    %140 = arith.mulf %135, %139 : vector<16x32xf32>
    %141 = vector.broadcast %112 : vector<1x32xf32> to vector<16x32xf32>
    %142 = arith.mulf %140, %141 : vector<16x32xf32>
    %143 = vector.broadcast %113 : vector<1x32xf32> to vector<16x32xf32>
    %144 = arith.addf %142, %143 : vector<16x32xf32>
    %c0_49 = arith.constant 0 : index
    %c0_50 = arith.constant 0 : index
    %145 = vector.load %arg5[%c0_49, %c0_50] : memref<32x64xf32, #tpu.memory_space<vmem>>, vector<32x64xf32>
    %cst_51 = arith.constant dense<0.000000e+00> : vector<16x64xf32>
    %146 = tpu.matmul %144, %145, %cst_51 {dimension_numbers = #tpu.dot_dimension_numbers<[1], [0], [0], [1], [0, 0, 1, 1], [], []>} : vector<16x32xf32>, vector<32x64xf32>, vector<16x64xf32> -> vector<16x64xf32>
    %c0_52 = arith.constant 0 : index
    %c0_53 = arith.constant 0 : index
    %147 = vector.load %arg6[%c0_52, %c0_53] : memref<1x64xf32, #tpu.memory_space<vmem>>, vector<1x64xf32>
    %148 = vector.broadcast %147 : vector<1x64xf32> to vector<16x64xf32>
    %149 = arith.addf %146, %148 : vector<16x64xf32>
    %cst_54 = arith.constant 0.000000e+00 : f32
    %150 = vector.broadcast %cst_54 : f32 to vector<16x64xf32>
    %151 = arith.maximumf %149, %150 : vector<16x64xf32>
    %c0_55 = arith.constant 0 : index
    %c0_56 = arith.constant 0 : index
    %152 = vector.load %arg7[%c0_55, %c0_56] : memref<64x32xf32, #tpu.memory_space<vmem>>, vector<64x32xf32>
    %cst_57 = arith.constant dense<0.000000e+00> : vector<16x32xf32>
    %153 = tpu.matmul %151, %152, %cst_57 {dimension_numbers = #tpu.dot_dimension_numbers<[1], [0], [0], [1], [0, 0, 1, 1], [], []>} : vector<16x64xf32>, vector<64x32xf32>, vector<16x32xf32> -> vector<16x32xf32>
    %154 = vector.broadcast %114 : vector<1x32xf32> to vector<16x32xf32>
    %155 = arith.addf %153, %154 : vector<16x32xf32>
    %156 = arith.addf %144, %155 : vector<16x32xf32>
    %cst_58 = arith.constant dense<0.000000e+00> : vector<16xf32>
    %157 = vector.multi_reduction <add>, %156, %cst_58 [1] : vector<16x32xf32> to vector<16xf32>
    %158 = vector.shape_cast %157 : vector<16xf32> to vector<16x1xf32>
    %cst_59 = arith.constant 3.200000e+01 : f32
    %159 = vector.broadcast %cst_59 : f32 to vector<16x1xf32>
    %160 = arith.divf %158, %159 : vector<16x1xf32>
    %161 = vector.broadcast %160 : vector<16x1xf32> to vector<16x32xf32>
    %162 = arith.subf %156, %161 : vector<16x32xf32>
    %163 = arith.mulf %162, %162 : vector<16x32xf32>
    %cst_60 = arith.constant dense<0.000000e+00> : vector<16xf32>
    %164 = vector.multi_reduction <add>, %163, %cst_60 [1] : vector<16x32xf32> to vector<16xf32>
    %165 = vector.shape_cast %164 : vector<16xf32> to vector<16x1xf32>
    %cst_61 = arith.constant 3.200000e+01 : f32
    %166 = vector.broadcast %cst_61 : f32 to vector<16x1xf32>
    %167 = arith.divf %165, %166 : vector<16x1xf32>
    %168 = vector.broadcast %160 : vector<16x1xf32> to vector<16x32xf32>
    %169 = arith.subf %156, %168 : vector<16x32xf32>
    %cst_62 = arith.constant 9.99999974E-6 : f32
    %170 = vector.broadcast %cst_62 : f32 to vector<16x1xf32>
    %171 = arith.addf %167, %170 : vector<16x1xf32>
    %172 = math.rsqrt %171 : vector<16x1xf32>
    %173 = vector.broadcast %172 : vector<16x1xf32> to vector<16x32xf32>
    %174 = arith.mulf %169, %173 : vector<16x32xf32>
    %175 = vector.broadcast %115 : vector<1x32xf32> to vector<16x32xf32>
    %176 = arith.mulf %174, %175 : vector<16x32xf32>
    %177 = vector.broadcast %116 : vector<1x32xf32> to vector<16x32xf32>
    %178 = arith.addf %176, %177 : vector<16x32xf32>
    %179 = vector.shape_cast %178 : vector<16x32xf32> to vector<2x8x32xf32>
    %c0_63 = arith.constant 0 : index
    %c0_64 = arith.constant 0 : index
    %c0_65 = arith.constant 0 : index
    %180 = vector.load %arg9[%c0_63, %c0_64, %c0_65] : memref<2x8x32xf32, #tpu.memory_space<vmem>>, vector<2x8x32xf32>
    tpu.vector_store %arg9[%c0_63, %c0_64, %c0_65], %179 {strides = array<i32>} : memref<2x8x32xf32, #tpu.memory_space<vmem>>, vector<2x8x32xf32>,
    return
  }
  func.func @transform_0(%arg0: i32) -> (i32, i32, i32) {
    %c0_i32 = arith.constant 0 : i32
    %c0_i32_0 = arith.constant 0 : i32
    %c0_i32_1 = arith.constant 0 : i32
    return %arg0, %c0_i32, %c0_i32_0 : i32, i32, i32
  }
  func.func @transform_1(%arg0: i32) -> (i32, i32) {
    %c0_i32 = arith.constant 0 : i32
    %c0_i32_0 = arith.constant 0 : i32
    %c0_i32_1 = arith.constant 0 : i32
    return %c0_i32, %c0_i32_0 : i32, i32
  }
  func.func @transform_2(%arg0: i32) -> (i32, i32) {
    %c0_i32 = arith.constant 0 : i32
    %c0_i32_0 = arith.constant 0 : i32
    %c0_i32_1 = arith.constant 0 : i32
    return %c0_i32, %c0_i32_0 : i32, i32
  }
  func.func @transform_3(%arg0: i32) -> (i32, i32) {
    %c0_i32 = arith.constant 0 : i32
    %c0_i32_0 = arith.constant 0 : i32
    %c0_i32_1 = arith.constant 0 : i32
    return %c0_i32, %c0_i32_0 : i32, i32
  }
  func.func @transform_4(%arg0: i32) -> (i32, i32) {
    %c0_i32 = arith.constant 0 : i32
    %c0_i32_0 = arith.constant 0 : i32
    %c0_i32_1 = arith.constant 0 : i32
    return %c0_i32, %c0_i32_0 : i32, i32
  }
  func.func @transform_5(%arg0: i32) -> (i32, i32) {
    %c0_i32 = arith.constant 0 : i32
    %c0_i32_0 = arith.constant 0 : i32
    %c0_i32_1 = arith.constant 0 : i32
    return %c0_i32, %c0_i32_0 : i32, i32
  }
  func.func @transform_6(%arg0: i32) -> (i32, i32) {
    %c0_i32 = arith.constant 0 : i32
    %c0_i32_0 = arith.constant 0 : i32
    %c0_i32_1 = arith.constant 0 : i32
    return %c0_i32, %c0_i32_0 : i32, i32
  }
  func.func @transform_7(%arg0: i32) -> (i32, i32) {
    %c0_i32 = arith.constant 0 : i32
    %c0_i32_0 = arith.constant 0 : i32
    %c0_i32_1 = arith.constant 0 : i32
    return %c0_i32, %c0_i32_0 : i32, i32
  }
  func.func @transform_8(%arg0: i32) -> (i32, i32, i32) {
    %c0_i32 = arith.constant 0 : i32
    %c0_i32_0 = arith.constant 0 : i32
    %c0_i32_1 = arith.constant 0 : i32
    return %arg0, %c0_i32, %c0_i32_0 : i32, i32, i32
  }
}

</mosaic_0001>

<llo_original>
// kernel: tpu_custom_call.1
$region0: #{tpu_custom_call.1}
  #allocation0 [shape = 'u32[]', space=smem, size = 0x4, offset = 0x4, fixed_abs, tag = 'smem constant byte address 0x4 - core index']
  #allocation1 [shape = 'u32[72,128]{1,0:T(1,128)}', space=vmem, size = 0x9000, scoped, tag = 'internal scratch']
  #allocation2 [shape = 'f32[16,32]{1,0:T(8,128)}', space=vmem, size = 0x2000, scoped, tag = 'scratch operand']
  %s0 = inlined_call_operand.hbm [shape: f32[2,8,32], index: 0, kind: input, shape index: {}]
  %s1 = inlined_call_operand.vmem [shape: f32[32,96], index: 1, kind: input, shape index: {}]
  %s2 = inlined_call_operand.vmem [shape: f32[1,96], index: 2, kind: input, shape index: {}]
  %s3 = inlined_call_operand.vmem [shape: f32[32,32], index: 3, kind: input, shape index: {}]
  %s4 = inlined_call_operand.vmem [shape: f32[32,64], index: 4, kind: input, shape index: {}]
  %s5 = inlined_call_operand.vmem [shape: f32[1,64], index: 5, kind: input, shape index: {}]
  %s6 = inlined_call_operand.vmem [shape: f32[64,32], index: 6, kind: input, shape index: {}]
  %s7 = inlined_call_operand.hbm [shape: f32[6,32], index: 7, kind: input, shape index: {}]
  %s8 = inlined_call_operand.hbm [shape: f32[2,8,32], index: 8, kind: output, shape index: {}]
  %s9 = sld [smem:[#allocation0]]
  $region50: #{tpu_custom_call.1} parent=0
    _
  %s11 = ssub.s32 1, %s9
  %s12 = scalar_select 0, %s11, %s9
  $region1: #{tpu_custom_call.1} parent=0
    #allocation3 [shape = 'u8[8192]{0}', space=vmem, size = 0x2000, scoped, tag = 'input window, operand 0, single buffered']
    #allocation4 [shape = 's32[1]{0}', space=sflag, size = 0x4, scoped, tag = 'scoped memory for tpu_custom_call.1']
    #allocation5 [shape = 's32[1]{0}', space=sflag, size = 0x4, scoped, tag = 'scoped memory for tpu_custom_call.1']
    #allocation6 [shape = 'u8[4096]{0}', space=vmem, size = 0x1000, scoped, tag = 'input window, operand 7, single buffered']
    #allocation7 [shape = 's32[1]{0}', space=sflag, size = 0x4, scoped, tag = 'scoped memory for tpu_custom_call.1']
    #allocation8 [shape = 'u8[8192]{0}', space=vmem, size = 0x2000, scoped, tag = 'output window, operand 0, single buffered']
    %13 = vsyncpa [#allocation4], 0
    %14 = vsyncpa [#allocation7], 0
    %15 = vsyncpa [#allocation5], 0
    // Predicated region
    $region2: #{tpu_custom_call.1} parent=1 // pred_check
      _
    $region3: #{tpu_custom_call.1} parent=1 // pred_check_branch
      %17 = sbr.rel (0) target = $region5
    $region4: #{tpu_custom_call.1} parent=1 // pred_region
      %19 = vsyncadd [#allocation4], 0
      %s20 = sshll.u32 %s0, 4
      %s21 = int_to_ptr.hbm [resolvable:$true] %s20
      %s22 = sshll.u32 [#allocation3], 4
      %s23 = int_to_ptr.vmem [resolvable:$true] %s22
      %28 = dma.hbm_to_vmem [thread:$0]  %s21, 256, %s23, [#allocation4], 128, 128, 8
    $region5: #{tpu_custom_call.1} parent=1 // pred_fallthru
      _
    // Predicated region
    $region6: #{tpu_custom_call.1} parent=1 // pred_check
      _
    $region7: #{tpu_custom_call.1} parent=1 // pred_check_branch
      %30 = sbr.rel (0) target = $region9
    $region8: #{tpu_custom_call.1} parent=1 // pred_region
      _
    $region9: #{tpu_custom_call.1} parent=1 // pred_fallthru
      _
    // Predicated region
    $region10: #{tpu_custom_call.1} parent=1 // pred_check
      _
    $region11: #{tpu_custom_call.1} parent=1 // pred_check_branch
      %32 = sbr.rel (0) target = $region13
    $region12: #{tpu_custom_call.1} parent=1 // pred_region
      _
    $region13: #{tpu_custom_call.1} parent=1 // pred_fallthru
      _
    // Predicated region
    $region14: #{tpu_custom_call.1} parent=1 // pred_check
      _
    $region15: #{tpu_custom_call.1} parent=1 // pred_check_branch
      %34 = sbr.rel (0) target = $region17
    $region16: #{tpu_custom_call.1} parent=1 // pred_region
      _
    $region17: #{tpu_custom_call.1} parent=1 // pred_fallthru
      _
    // Predicated region
    $region18: #{tpu_custom_call.1} parent=1 // pred_check
      _
    $region19: #{tpu_custom_call.1} parent=1 // pred_check_branch
      %36 = sbr.rel (0) target = $region21
    $region20: #{tpu_custom_call.1} parent=1 // pred_region
      _
    $region21: #{tpu_custom_call.1} parent=1 // pred_fallthru
      _
    // Predicated region
    $region22: #{tpu_custom_call.1} parent=1 // pred_check
      _
    $region23: #{tpu_custom_call.1} parent=1 // pred_check_branch
      %38 = sbr.rel (0) target = $region25
    $region24: #{tpu_custom_call.1} parent=1 // pred_region
      _
    $region25: #{tpu_custom_call.1} parent=1 // pred_fallthru
      _
    // Predicated region
    $region26: #{tpu_custom_call.1} parent=1 // pred_check
      _
    $region27: #{tpu_custom_call.1} parent=1 // pred_check_branch
      %40 = sbr.rel (0) target = $region29
    $region28: #{tpu_custom_call.1} parent=1 // pred_region
      _
    $region29: #{tpu_custom_call.1} parent=1 // pred_fallthru
      _
    // Predicated region
    $region30: #{tpu_custom_call.1} parent=1 // pred_check
      _
    $region31: #{tpu_custom_call.1} parent=1 // pred_check_branch
      %42 = sbr.rel (0) target = $region33
    $region32: #{tpu_custom_call.1} parent=1 // pred_region
      %44 = vsyncadd [#allocation7], 0
      %s46 = sshll.u32 %s7, 4
      %s47 = int_to_ptr.hbm [resolvable:$true] %s46
      %s48 = sshll.u32 [#allocation6], 4
      %s49 = int_to_ptr.vmem [resolvable:$true] %s48
      %51 = dma.hbm_to_vmem [thread:$0]  %s47, 128, %s49, [#allocation7]
    $region33: #{tpu_custom_call.1} parent=1 // pred_fallthru
      _
    // Predicated region
    $region34: #{tpu_custom_call.1} parent=1 // pred_check
      _
    $region35: #{tpu_custom_call.1} parent=1 // pred_check_branch
      %53 = sbr.rel (0) target = $region37
    $region36: #{tpu_custom_call.1} parent=1 // pred_region
      %55 = dma.done [#allocation4], 256
    $region37: #{tpu_custom_call.1} parent=1 // pred_fallthru
      _
    // Predicated region
    $region38: #{tpu_custom_call.1} parent=1 // pred_check
      _
    $region39: #{tpu_custom_call.1} parent=1 // pred_check_branch
      %57 = sbr.rel (0) target = $region41
    $region40: #{tpu_custom_call.1} parent=1 // pred_region
      %59 = dma.done [#allocation7], 128
    $region41: #{tpu_custom_call.1} parent=1 // pred_fallthru
      _
    %v60 = vld [vmem:[#allocation3] sm:$0xff]
    %v61 = vld [vmem:[#allocation3 + $0x8] sm:$0xff]
    %v62 = vld [vmem:[%s1] sm:$0xff]
    %v63 = vld [vmem:[%s1 + $0x8] sm:$0xff]
    %v64 = vld [vmem:[%s1 + $0x10] sm:$0xff]
    %v65 = vld [vmem:[%s1 + $0x18] sm:$0xff]
    %v66 = vld [vmem:[%s2] sm:$0x1]
    %v68 = vperm.slane %v66, 0
    %vm70 = vcmask 261120
    %v72 = vsel %vm70, %v60, 0
    %v75 = vsel %vm70, %v61, 0
    %77 = vmatpush.msra.mxu0 0.0
    %78 = vmatpush.msra.mxu0 0.0
    %79 = vmatpush.msra.mxu0 0.0
    %80 = vmatpush.msra.mxu0 0.0
    %81 = vmatpush.msra.mxu0 0.0
    %82 = vmatpush.msra.mxu0 0.0
    %83 = vmatpush.msra.mxu0 0.0
    %84 = vmatpush.msra.mxu0 0.0
    %85 = vmatpush.msra.mxu0 0.0
    %86 = vmatpush.msra.mxu0 0.0
    %87 = vmatpush.msra.mxu0 0.0
    %88 = vmatpush.msra.mxu0 0.0
    %89 = vmatpush.msra.mxu0 %v65
    %90 = vmatpush.msra.mxu0 %v64
    %91 = vmatpush.msra.mxu0 %v63
    %92 = vmatpush.msra.mxu0 %v62
    %93 = vmatmul.f32.gmra.mxu0 %v72
    %v94 = vpop.f32.mrf.mxu0
    %v95 = vadd.f32 %v68, %v94
    %96 = vmatmul.f32.gmra.mxu0 %v75
    %v97 = vpop.f32.mrf.mxu0
    %v98 = vadd.f32 %v68, %v97
    %99 = vdwg.mxu0
    %v100 = vmul.f32 %v95, 0.35355338
    %v101 = vmul.f32 %v98, 0.35355338
    %v102 = vlaneseq
    %v103 = vshrl.u32 %v102, 7
    %v104 = vlaneseq
    %v105 = vand.u32 %v104, 127
    %vm106 = vcmp.ge.s32.totalorder %v103, %v105
    %108 = vrot.lane.b32.xlu0 %v95, 96
    %v109 = vpop.permute.xlu0 %108
    %vm110 = vcmask 64512
    %v112 = vsel %vm110, %v100, 0
    %v114 = vsel %vm110, %v109, 0
    %116 = vmatpush.xpose.msra.mxu0 0.0
    %117 = vmatpush.xpose.msra.mxu0 0.0
    %118 = vmatpush.xpose.msra.mxu0 0.0
    %119 = vmatpush.xpose.msra.mxu0 0.0
    %120 = vmatpush.xpose.msra.mxu0 0.0
    %121 = vmatpush.xpose.msra.mxu0 0.0
    %122 = vmatpush.xpose.msra.mxu0 0.0
    %123 = vmatpush.xpose.msra.mxu0 0.0
    %124 = vmatpush.xpose.msra.mxu0 0.0
    %125 = vmatpush.xpose.msra.mxu0 0.0
    %126 = vmatpush.xpose.msra.mxu0 0.0
    %127 = vmatpush.xpose.msra.mxu0 0.0
    %128 = vmatpush.xpose.msra.mxu0 0.0
    %129 = vmatpush.xpose.msra.mxu0 0.0
    %130 = vmatpush.xpose.msra.mxu0 0.0
    %131 = vmatpush.xpose.msra.mxu0 %v114
    %132 = vmatmul.f32.gmra.mxu0 %v112
    %v133 = vpop.f32.mrf.mxu0
    %v134 = vadd.f32 0.0, %v133
    %135 = vdwg.mxu0
    %137 = vrot.lane.b32.xlu0 %v98, 96
    %v138 = vpop.permute.xlu0 %137
    %v140 = vsel %vm110, %v101, 0
    %v142 = vsel %vm110, %v138, 0
    %144 = vmatpush.xpose.msra.mxu0 0.0
    %145 = vmatpush.xpose.msra.mxu0 0.0
    %146 = vmatpush.xpose.msra.mxu0 0.0
    %147 = vmatpush.xpose.msra.mxu0 0.0
    %148 = vmatpush.xpose.msra.mxu0 0.0
    %149 = vmatpush.xpose.msra.mxu0 0.0
    %150 = vmatpush.xpose.msra.mxu0 0.0
    %151 = vmatpush.xpose.msra.mxu0 0.0
    %152 = vmatpush.xpose.msra.mxu0 0.0
    %153 = vmatpush.xpose.msra.mxu0 0.0
    %154 = vmatpush.xpose.msra.mxu0 0.0
    %155 = vmatpush.xpose.msra.mxu0 0.0
    %156 = vmatpush.xpose.msra.mxu0 0.0
    %157 = vmatpush.xpose.msra.mxu0 0.0
    %158 = vmatpush.xpose.msra.mxu0 0.0
    %159 = vmatpush.xpose.msra.mxu0 %v142
    %160 = vmatmul.f32.gmra.mxu0 %v140
    %v161 = vpop.f32.mrf.mxu0
    %v162 = vadd.f32 0.0, %v161
    %163 = vdwg.mxu0
    %v164 = vsel %vm106, 1, 0
    %vm165 = vcmp.eq.s32.totalorder %v164, 1
    %v166 = vsel %vm165, %v134, -inf
    %v167 = vsel %vm165, %v162, -inf
    %v168 = vsel %vm110, %v166, -inf
    %169 = vmax.xlane.f32.xlu0 %v168
    %v170 = vpop.xlane.xlu0 %169
    %v171 = vsel %vm110, %v167, -inf
    %172 = vmax.xlane.f32.xlu0 %v171
    %v173 = vpop.xlane.xlu0 %172
    %v174 = vsub.f32 %v166, %v170
    %v175 = vsub.f32 %v167, %v173
    %v176 = vmul.f32 %v174, 1.442695
    %v177 = vpow.pop %v176
    %v178 = vmul.f32 %v175, 1.442695
    %v179 = vpow.pop %v178
    %v180 = vsel %vm110, %v177, 0.0
    %181 = vadd.xlane.f32.xlu0 %v180
    %v182 = vpop.xlane.xlu0 %181
    %v183 = vsel %vm110, %v179, 0.0
    %184 = vadd.xlane.f32.xlu0 %v183
    %v185 = vpop.xlane.xlu0 %184
    %v186 = vrcp.pop %v182
    %v187 = vrcp.pop %v185
    %v188 = vmul.f32 %v177, %v186
    %v189 = vmul.f32 %v179, %v187
    %190 = vrot.lane.b32.xlu0 %v95, 64
    %v191 = vpop.permute.xlu0 %190
    %v194 = vsel %vm110, %v188, 0
    %196 = vmatpush.msra.mxu0 0.0
    %197 = vmatpush.msra.mxu0 0.0
    %198 = vmatpush.msra.mxu0 0.0
    %199 = vmatpush.msra.mxu0 0.0
    %200 = vmatpush.msra.mxu0 0.0
    %201 = vmatpush.msra.mxu0 0.0
    %202 = vmatpush.msra.mxu0 0.0
    %203 = vmatpush.msra.mxu0 0.0
    %204 = vmatpush.msra.mxu0 0.0
    %205 = vmatpush.msra.mxu0 0.0
    %206 = vmatpush.msra.mxu0 0.0
    %207 = vmatpush.msra.mxu0 0.0
    %208 = vmatpush.msra.mxu0 0.0
    %209 = vmatpush.msra.mxu0 0.0
    %210 = vmatpush.msra.mxu0 0.0
    %211 = vmatpush.msra.mxu0 %v191
    %212 = vmatmul.f32.gmra.mxu0 %v194
    %v213 = vpop.f32.mrf.mxu0
    %v214 = vadd.f32 0.0, %v213
    %215 = vdwg.mxu0
    %216 = vrot.lane.b32.xlu0 %v98, 64
    %v217 = vpop.permute.xlu0 %216
    %v220 = vsel %vm110, %v189, 0
    %222 = vmatpush.msra.mxu0 0.0
    %223 = vmatpush.msra.mxu0 0.0
    %224 = vmatpush.msra.mxu0 0.0
    %225 = vmatpush.msra.mxu0 0.0
    %226 = vmatpush.msra.mxu0 0.0
    %227 = vmatpush.msra.mxu0 0.0
    %228 = vmatpush.msra.mxu0 0.0
    %229 = vmatpush.msra.mxu0 0.0
    %230 = vmatpush.msra.mxu0 0.0
    %231 = vmatpush.msra.mxu0 0.0
    %232 = vmatpush.msra.mxu0 0.0
    %233 = vmatpush.msra.mxu0 0.0
    %234 = vmatpush.msra.mxu0 0.0
    %235 = vmatpush.msra.mxu0 0.0
    %236 = vmatpush.msra.mxu0 0.0
    %237 = vmatpush.msra.mxu0 %v217
    %238 = vmatmul.f32.gmra.mxu0 %v220
    %v239 = vpop.f32.mrf.mxu0
    %v240 = vadd.f32 0.0, %v239
    %241 = vdwg.mxu0
    %242 = vst.msk [vmem:[#allocation2] sm:$0xff] %vm110, %v214
    %243 = vst.msk [vmem:[#allocation2 + $0x8] sm:$0xff] %vm110, %v240
    %244 = vrot.lane.b32.xlu0 %v100, 120
    %v245 = vpop.permute.xlu0 %244
    %246 = vrot.lane.b32.xlu0 %v95, 88
    %v247 = vpop.permute.xlu0 %246
    %v248 = vsel %vm110, %v245, 0
    %v250 = vsel %vm110, %v247, 0
    %252 = vmatpush.xpose.msra.mxu0 0.0
    %253 = vmatpush.xpose.msra.mxu0 0.0
    %254 = vmatpush.xpose.msra.mxu0 0.0
    %255 = vmatpush.xpose.msra.mxu0 0.0
    %256 = vmatpush.xpose.msra.mxu0 0.0
    %257 = vmatpush.xpose.msra.mxu0 0.0
    %258 = vmatpush.xpose.msra.mxu0 0.0
    %259 = vmatpush.xpose.msra.mxu0 0.0
    %260 = vmatpush.xpose.msra.mxu0 0.0
    %261 = vmatpush.xpose.msra.mxu0 0.0
    %262 = vmatpush.xpose.msra.mxu0 0.0
    %263 = vmatpush.xpose.msra.mxu0 0.0
    %264 = vmatpush.xpose.msra.mxu0 0.0
    %265 = vmatpush.xpose.msra.mxu0 0.0
    %266 = vmatpush.xpose.msra.mxu0 0.0
    %267 = vmatpush.xpose.msra.mxu0 %v250
    %268 = vmatmul.f32.gmra.mxu0 %v248
    %v269 = vpop.f32.mrf.mxu0
    %v270 = vadd.f32 0.0, %v269
    %271 = vdwg.mxu0
    %272 = vrot.lane.b32.xlu0 %v101, 120
    %v273 = vpop.permute.xlu0 %272
    %274 = vrot.lane.b32.xlu0 %v98, 88
    %v275 = vpop.permute.xlu0 %274
    %v276 = vsel %vm110, %v273, 0
    %v278 = vsel %vm110, %v275, 0
    %280 = vmatpush.xpose.msra.mxu0 0.0
    %281 = vmatpush.xpose.msra.mxu0 0.0
    %282 = vmatpush.xpose.msra.mxu0 0.0
    %283 = vmatpush.xpose.msra.mxu0 0.0
    %284 = vmatpush.xpose.msra.mxu0 0.0
    %285 = vmatpush.xpose.msra.mxu0 0.0
    %286 = vmatpush.xpose.msra.mxu0 0.0
    %287 = vmatpush.xpose.msra.mxu0 0.0
    %288 = vmatpush.xpose.msra.mxu0 0.0
    %289 = vmatpush.xpose.msra.mxu0 0.0
    %290 = vmatpush.xpose.msra.mxu0 0.0
    %291 = vmatpush.xpose.msra.mxu0 0.0
    %292 = vmatpush.xpose.msra.mxu0 0.0
    %293 = vmatpush.xpose.msra.mxu0 0.0
    %294 = vmatpush.xpose.msra.mxu0 0.0
    %295 = vmatpush.xpose.msra.mxu0 %v278
    %296 = vmatmul.f32.gmra.mxu0 %v276
    %v297 = vpop.f32.mrf.mxu0
    %v298 = vadd.f32 0.0, %v297
    %299 = vdwg.mxu0
    %v300 = vsel %vm165, %v270, -inf
    %v301 = vsel %vm165, %v298, -inf
    %v302 = vsel %vm110, %v300, -inf
    %303 = vmax.xlane.f32.xlu0 %v302
    %v304 = vpop.xlane.xlu0 %303
    %v305 = vsel %vm110, %v301, -inf
    %306 = vmax.xlane.f32.xlu0 %v305
    %v307 = vpop.xlane.xlu0 %306
    %v308 = vsub.f32 %v300, %v304
    %v309 = vsub.f32 %v301, %v307
    %v310 = vmul.f32 %v308, 1.442695
    %v311 = vpow.pop %v310
    %v312 = vmul.f32 %v309, 1.442695
    %v313 = vpow.pop %v312
    %v314 = vsel %vm110, %v311, 0.0
    %315 = vadd.xlane.f32.xlu0 %v314
    %v316 = vpop.xlane.xlu0 %315
    %v317 = vsel %vm110, %v313, 0.0
    %318 = vadd.xlane.f32.xlu0 %v317
    %v319 = vpop.xlane.xlu0 %318
    %v320 = vrcp.pop %v316
    %v321 = vrcp.pop %v319
    %v322 = vmul.f32 %v311, %v320
    %v323 = vmul.f32 %v313, %v321
    %324 = vrot.lane.b32.xlu0 %v95, 56
    %v325 = vpop.permute.xlu0 %324
    %v328 = vsel %vm110, %v322, 0
    %330 = vmatpush.msra.mxu0 0.0
    %331 = vmatpush.msra.mxu0 0.0
    %332 = vmatpush.msra.mxu0 0.0
    %333 = vmatpush.msra.mxu0 0.0
    %334 = vmatpush.msra.mxu0 0.0
    %335 = vmatpush.msra.mxu0 0.0
    %336 = vmatpush.msra.mxu0 0.0
    %337 = vmatpush.msra.mxu0 0.0
    %338 = vmatpush.msra.mxu0 0.0
    %339 = vmatpush.msra.mxu0 0.0
    %340 = vmatpush.msra.mxu0 0.0
    %341 = vmatpush.msra.mxu0 0.0
    %342 = vmatpush.msra.mxu0 0.0
    %343 = vmatpush.msra.mxu0 0.0
    %344 = vmatpush.msra.mxu0 0.0
    %345 = vmatpush.msra.mxu0 %v325
    %346 = vmatmul.f32.gmra.mxu0 %v328
    %v347 = vpop.f32.mrf.mxu0
    %v348 = vadd.f32 0.0, %v347
    %349 = vdwg.mxu0
    %350 = vrot.lane.b32.xlu0 %v98, 56
    %v351 = vpop.permute.xlu0 %350
    %v354 = vsel %vm110, %v323, 0
    %356 = vmatpush.msra.mxu0 0.0
    %357 = vmatpush.msra.mxu0 0.0
    %358 = vmatpush.msra.mxu0 0.0
    %359 = vmatpush.msra.mxu0 0.0
    %360 = vmatpush.msra.mxu0 0.0
    %361 = vmatpush.msra.mxu0 0.0
    %362 = vmatpush.msra.mxu0 0.0
    %363 = vmatpush.msra.mxu0 0.0
    %364 = vmatpush.msra.mxu0 0.0
    %365 = vmatpush.msra.mxu0 0.0
    %366 = vmatpush.msra.mxu0 0.0
    %367 = vmatpush.msra.mxu0 0.0
    %368 = vmatpush.msra.mxu0 0.0
    %369 = vmatpush.msra.mxu0 0.0
    %370 = vmatpush.msra.mxu0 0.0
    %371 = vmatpush.msra.mxu0 %v351
    %372 = vmatmul.f32.gmra.mxu0 %v354
    %v373 = vpop.f32.mrf.mxu0
    %v374 = vadd.f32 0.0, %v373
    %375 = vdwg.mxu0
    %378 = vrot.lane.b32.xlu0 %v348, 8
    %v379 = vpop.permute.xlu0 %378
    %380 = vrot.lane.b32.xlu0 %v374, 8
    %v381 = vpop.permute.xlu0 %380
    %vm384 = vcmask 130112
    %385 = vst.msk [vmem:[#allocation2] sm:$0xff] %vm384, %v379
    %386 = vst.msk [vmem:[#allocation2 + $0x8] sm:$0xff] %vm384, %v381
    %387 = vrot.lane.b32.xlu0 %v100, 112
    %v388 = vpop.permute.xlu0 %387
    %389 = vrot.lane.b32.xlu0 %v95, 80
    %v390 = vpop.permute.xlu0 %389
    %v391 = vsel %vm110, %v388, 0
    %v393 = vsel %vm110, %v390, 0
    %395 = vmatpush.xpose.msra.mxu0 0.0
    %396 = vmatpush.xpose.msra.mxu0 0.0
    %397 = vmatpush.xpose.msra.mxu0 0.0
    %398 = vmatpush.xpose.msra.mxu0 0.0
    %399 = vmatpush.xpose.msra.mxu0 0.0
    %400 = vmatpush.xpose.msra.mxu0 0.0
    %401 = vmatpush.xpose.msra.mxu0 0.0
    %402 = vmatpush.xpose.msra.mxu0 0.0
    %403 = vmatpush.xpose.msra.mxu0 0.0
    %404 = vmatpush.xpose.msra.mxu0 0.0
    %405 = vmatpush.xpose.msra.mxu0 0.0
    %406 = vmatpush.xpose.msra.mxu0 0.0
    %407 = vmatpush.xpose.msra.mxu0 0.0
    %408 = vmatpush.xpose.msra.mxu0 0.0
    %409 = vmatpush.xpose.msra.mxu0 0.0
    %410 = vmatpush.xpose.msra.mxu0 %v393
    %411 = vmatmul.f32.gmra.mxu0 %v391
    %v412 = vpop.f32.mrf.mxu0
    %v413 = vadd.f32 0.0, %v412
    %414 = vdwg.mxu0
    %415 = vrot.lane.b32.xlu0 %v101, 112
    %v416 = vpop.permute.xlu0 %415
    %417 = vrot.lane.b32.xlu0 %v98, 80
    %v418 = vpop.permute.xlu0 %417
    %v419 = vsel %vm110, %v416, 0
    %v421 = vsel %vm110, %v418, 0
    %423 = vmatpush.xpose.msra.mxu0 0.0
    %424 = vmatpush.xpose.msra.mxu0 0.0
    %425 = vmatpush.xpose.msra.mxu0 0.0
    %426 = vmatpush.xpose.msra.mxu0 0.0
    %427 = vmatpush.xpose.msra.mxu0 0.0
    %428 = vmatpush.xpose.msra.mxu0 0.0
    %429 = vmatpush.xpose.msra.mxu0 0.0
    %430 = vmatpush.xpose.msra.mxu0 0.0
    %431 = vmatpush.xpose.msra.mxu0 0.0
    %432 = vmatpush.xpose.msra.mxu0 0.0
    %433 = vmatpush.xpose.msra.mxu0 0.0
    %434 = vmatpush.xpose.msra.mxu0 0.0
    %435 = vmatpush.xpose.msra.mxu0 0.0
    %436 = vmatpush.xpose.msra.mxu0 0.0
    %437 = vmatpush.xpose.msra.mxu0 0.0
    %438 = vmatpush.xpose.msra.mxu0 %v421
    %439 = vmatmul.f32.gmra.mxu0 %v419
    %v440 = vpop.f32.mrf.mxu0
    %v441 = vadd.f32 0.0, %v440
    %442 = vdwg.mxu0
    %v443 = vsel %vm165, %v413, -inf
    %v444 = vsel %vm165, %v441, -inf
    %v445 = vsel %vm110, %v443, -inf
    %446 = vmax.xlane.f32.xlu0 %v445
    %v447 = vpop.xlane.xlu0 %446
    %v448 = vsel %vm110, %v444, -inf
    %449 = vmax.xlane.f32.xlu0 %v448
    %v450 = vpop.xlane.xlu0 %449
    %v451 = vsub.f32 %v443, %v447
    %v452 = vsub.f32 %v444, %v450
    %v453 = vmul.f32 %v451, 1.442695
    %v454 = vpow.pop %v453
    %v455 = vmul.f32 %v452, 1.442695
    %v456 = vpow.pop %v455
    %v457 = vsel %vm110, %v454, 0.0
    %458 = vadd.xlane.f32.xlu0 %v457
    %v459 = vpop.xlane.xlu0 %458
    %v460 = vsel %vm110, %v456, 0.0
    %461 = vadd.xlane.f32.xlu0 %v460
    %v462 = vpop.xlane.xlu0 %461
    %v463 = vrcp.pop %v459
    %v464 = vrcp.pop %v462
    %v465 = vmul.f32 %v454, %v463
    %v466 = vmul.f32 %v456, %v464
    %467 = vrot.lane.b32.xlu0 %v95, 48
    %v468 = vpop.permute.xlu0 %467
    %v471 = vsel %vm110, %v465, 0
    %473 = vmatpush.msra.mxu0 0.0
    %474 = vmatpush.msra.mxu0 0.0
    %475 = vmatpush.msra.mxu0 0.0
    %476 = vmatpush.msra.mxu0 0.0
    %477 = vmatpush.msra.mxu0 0.0
    %478 = vmatpush.msra.mxu0 0.0
    %479 = vmatpush.msra.mxu0 0.0
    %480 = vmatpush.msra.mxu0 0.0
    %481 = vmatpush.msra.mxu0 0.0
    %482 = vmatpush.msra.mxu0 0.0
    %483 = vmatpush.msra.mxu0 0.0
    %484 = vmatpush.msra.mxu0 0.0
    %485 = vmatpush.msra.mxu0 0.0
    %486 = vmatpush.msra.mxu0 0.0
    %487 = vmatpush.msra.mxu0 0.0
    %488 = vmatpush.msra.mxu0 %v468
    %489 = vmatmul.f32.gmra.mxu0 %v471
    %v490 = vpop.f32.mrf.mxu0
    %v491 = vadd.f32 0.0, %v490
    %492 = vdwg.mxu0
    %493 = vrot.lane.b32.xlu0 %v98, 48
    %v494 = vpop.permute.xlu0 %493
    %v497 = vsel %vm110, %v466, 0
    %499 = vmatpush.msra.mxu0 0.0
    %500 = vmatpush.msra.mxu0 0.0
    %501 = vmatpush.msra.mxu0 0.0
    %502 = vmatpush.msra.mxu0 0.0
    %503 = vmatpush.msra.mxu0 0.0
    %504 = vmatpush.msra.mxu0 0.0
    %505 = vmatpush.msra.mxu0 0.0
    %506 = vmatpush.msra.mxu0 0.0
    %507 = vmatpush.msra.mxu0 0.0
    %508 = vmatpush.msra.mxu0 0.0
    %509 = vmatpush.msra.mxu0 0.0
    %510 = vmatpush.msra.mxu0 0.0
    %511 = vmatpush.msra.mxu0 0.0
    %512 = vmatpush.msra.mxu0 0.0
    %513 = vmatpush.msra.mxu0 0.0
    %514 = vmatpush.msra.mxu0 %v494
    %515 = vmatmul.f32.gmra.mxu0 %v497
    %v516 = vpop.f32.mrf.mxu0
    %v517 = vadd.f32 0.0, %v516
    %518 = vdwg.mxu0
    %521 = vrot.lane.b32.xlu0 %v491, 16
    %v522 = vpop.permute.xlu0 %521
    %523 = vrot.lane.b32.xlu0 %v517, 16
    %v524 = vpop.permute.xlu0 %523
    %vm527 = vcmask 195712
    %528 = vst.msk [vmem:[#allocation2] sm:$0xff] %vm527, %v522
    %529 = vst.msk [vmem:[#allocation2 + $0x8] sm:$0xff] %vm527, %v524
    %530 = vrot.lane.b32.xlu0 %v100, 104
    %v531 = vpop.permute.xlu0 %530
    %532 = vrot.lane.b32.xlu0 %v95, 72
    %v533 = vpop.permute.xlu0 %532
    %v534 = vsel %vm110, %v531, 0
    %v536 = vsel %vm110, %v533, 0
    %538 = vmatpush.xpose.msra.mxu0 0.0
    %539 = vmatpush.xpose.msra.mxu0 0.0
    %540 = vmatpush.xpose.msra.mxu0 0.0
    %541 = vmatpush.xpose.msra.mxu0 0.0
    %542 = vmatpush.xpose.msra.mxu0 0.0
    %543 = vmatpush.xpose.msra.mxu0 0.0
    %544 = vmatpush.xpose.msra.mxu0 0.0
    %545 = vmatpush.xpose.msra.mxu0 0.0
    %546 = vmatpush.xpose.msra.mxu0 0.0
    %547 = vmatpush.xpose.msra.mxu0 0.0
    %548 = vmatpush.xpose.msra.mxu0 0.0
    %549 = vmatpush.xpose.msra.mxu0 0.0
    %550 = vmatpush.xpose.msra.mxu0 0.0
    %551 = vmatpush.xpose.msra.mxu0 0.0
    %552 = vmatpush.xpose.msra.mxu0 0.0
    %553 = vmatpush.xpose.msra.mxu0 %v536
    %554 = vmatmul.f32.gmra.mxu0 %v534
    %v555 = vpop.f32.mrf.mxu0
    %v556 = vadd.f32 0.0, %v555
    %557 = vdwg.mxu0
    %558 = vrot.lane.b32.xlu0 %v101, 104
    %v559 = vpop.permute.xlu0 %558
    %560 = vrot.lane.b32.xlu0 %v98, 72
    %v561 = vpop.permute.xlu0 %560
    %v562 = vsel %vm110, %v559, 0
    %v564 = vsel %vm110, %v561, 0
    %566 = vmatpush.xpose.msra.mxu0 0.0
    %567 = vmatpush.xpose.msra.mxu0 0.0
    %568 = vmatpush.xpose.msra.mxu0 0.0
    %569 = vmatpush.xpose.msra.mxu0 0.0
    %570 = vmatpush.xpose.msra.mxu0 0.0
    %571 = vmatpush.xpose.msra.mxu0 0.0
    %572 = vmatpush.xpose.msra.mxu0 0.0
    %573 = vmatpush.xpose.msra.mxu0 0.0
    %574 = vmatpush.xpose.msra.mxu0 0.0
    %575 = vmatpush.xpose.msra.mxu0 0.0
    %576 = vmatpush.xpose.msra.mxu0 0.0
    %577 = vmatpush.xpose.msra.mxu0 0.0
    %578 = vmatpush.xpose.msra.mxu0 0.0
    %579 = vmatpush.xpose.msra.mxu0 0.0
    %580 = vmatpush.xpose.msra.mxu0 0.0
    %581 = vmatpush.xpose.msra.mxu0 %v564
    %582 = vmatmul.f32.gmra.mxu0 %v562
    %v583 = vpop.f32.mrf.mxu0
    %v584 = vadd.f32 0.0, %v583
    %585 = vdwg.mxu0
    %v586 = vsel %vm165, %v556, -inf
    %v587 = vsel %vm165, %v584, -inf
    %v588 = vsel %vm110, %v586, -inf
    %589 = vmax.xlane.f32.xlu0 %v588
    %v590 = vpop.xlane.xlu0 %589
    %v591 = vsel %vm110, %v587, -inf
    %592 = vmax.xlane.f32.xlu0 %v591
    %v593 = vpop.xlane.xlu0 %592
    %v594 = vsub.f32 %v586, %v590
    %v595 = vsub.f32 %v587, %v593
    %v596 = vmul.f32 %v594, 1.442695
    %v597 = vpow.pop %v596
    %v598 = vmul.f32 %v595, 1.442695
    %v599 = vpow.pop %v598
    %v600 = vsel %vm110, %v597, 0.0
    %601 = vadd.xlane.f32.xlu0 %v600
    %v602 = vpop.xlane.xlu0 %601
    %v603 = vsel %vm110, %v599, 0.0
    %604 = vadd.xlane.f32.xlu0 %v603
    %v605 = vpop.xlane.xlu0 %604
    %v606 = vrcp.pop %v602
    %v607 = vrcp.pop %v605
    %v608 = vmul.f32 %v597, %v606
    %v609 = vmul.f32 %v599, %v607
    %610 = vrot.lane.b32.xlu0 %v95, 40
    %v611 = vpop.permute.xlu0 %610
    %v614 = vsel %vm110, %v608, 0
    %616 = vmatpush.msra.mxu0 0.0
    %617 = vmatpush.msra.mxu0 0.0
    %618 = vmatpush.msra.mxu0 0.0
    %619 = vmatpush.msra.mxu0 0.0
    %620 = vmatpush.msra.mxu0 0.0
    %621 = vmatpush.msra.mxu0 0.0
    %622 = vmatpush.msra.mxu0 0.0
    %623 = vmatpush.msra.mxu0 0.0
    %624 = vmatpush.msra.mxu0 0.0
    %625 = vmatpush.msra.mxu0 0.0
    %626 = vmatpush.msra.mxu0 0.0
    %627 = vmatpush.msra.mxu0 0.0
    %628 = vmatpush.msra.mxu0 0.0
    %629 = vmatpush.msra.mxu0 0.0
    %630 = vmatpush.msra.mxu0 0.0
    %631 = vmatpush.msra.mxu0 %v611
    %632 = vmatmul.f32.gmra.mxu0 %v614
    %v633 = vpop.f32.mrf.mxu0
    %v634 = vadd.f32 0.0, %v633
    %635 = vdwg.mxu0
    %636 = vrot.lane.b32.xlu0 %v98, 40
    %v637 = vpop.permute.xlu0 %636
    %v640 = vsel %vm110, %v609, 0
    %642 = vmatpush.msra.mxu0 0.0
    %643 = vmatpush.msra.mxu0 0.0
    %644 = vmatpush.msra.mxu0 0.0
    %645 = vmatpush.msra.mxu0 0.0
    %646 = vmatpush.msra.mxu0 0.0
    %647 = vmatpush.msra.mxu0 0.0
    %648 = vmatpush.msra.mxu0 0.0
    %649 = vmatpush.msra.mxu0 0.0
    %650 = vmatpush.msra.mxu0 0.0
    %651 = vmatpush.msra.mxu0 0.0
    %652 = vmatpush.msra.mxu0 0.0
    %653 = vmatpush.msra.mxu0 0.0
    %654 = vmatpush.msra.mxu0 0.0
    %655 = vmatpush.msra.mxu0 0.0
    %656 = vmatpush.msra.mxu0 0.0
    %657 = vmatpush.msra.mxu0 %v637
    %658 = vmatmul.f32.gmra.mxu0 %v640
    %v659 = vpop.f32.mrf.mxu0
    %v660 = vadd.f32 0.0, %v659
    %661 = vdwg.mxu0
    %664 = vrot.lane.b32.xlu0 %v634, 24
    %v665 = vpop.permute.xlu0 %664
    %666 = vrot.lane.b32.xlu0 %v660, 24
    %v667 = vpop.permute.xlu0 %666
    %vm670 = vcmask 261312
    %671 = vst.msk [vmem:[#allocation2] sm:$0xff] %vm670, %v665
    %672 = vst.msk [vmem:[#allocation2 + $0x8] sm:$0xff] %vm670, %v667
    %v673 = vld [vmem:[#allocation6] sm:$0x1]
    %v674 = vld [vmem:[#allocation6 + $0x1] sm:$0x1]
    %v675 = vld [vmem:[#allocation6 + $0x2] sm:$0x1]
    %v676 = vld [vmem:[#allocation6 + $0x3] sm:$0x1]
    %v677 = vld [vmem:[#allocation6 + $0x4] sm:$0x1]
    %v678 = vld [vmem:[#allocation6 + $0x5] sm:$0x1]
    %v679 = vld [vmem:[#allocation2] sm:$0xff]
    %v680 = vld [vmem:[#allocation2 + $0x8] sm:$0xff]
    %v681 = vld [vmem:[%s3] sm:$0xff]
    %v682 = vld [vmem:[%s3 + $0x8] sm:$0xff]
    %v683 = vld [vmem:[%s3 + $0x10] sm:$0xff]
    %v684 = vld [vmem:[%s3 + $0x18] sm:$0xff]
    %v685 = vperm.slane %v673, 0
    %v687 = vsel %vm70, %v679, 0
    %v690 = vsel %vm70, %v680, 0
    %692 = vmatpush.msra.mxu0 0.0
    %693 = vmatpush.msra.mxu0 0.0
    %694 = vmatpush.msra.mxu0 0.0
    %695 = vmatpush.msra.mxu0 0.0
    %696 = vmatpush.msra.mxu0 0.0
    %697 = vmatpush.msra.mxu0 0.0
    %698 = vmatpush.msra.mxu0 0.0
    %699 = vmatpush.msra.mxu0 0.0
    %700 = vmatpush.msra.mxu0 0.0
    %701 = vmatpush.msra.mxu0 0.0
    %702 = vmatpush.msra.mxu0 0.0
    %703 = vmatpush.msra.mxu0 0.0
    %704 = vmatpush.msra.mxu0 %v684
    %705 = vmatpush.msra.mxu0 %v683
    %706 = vmatpush.msra.mxu0 %v682
    %707 = vmatpush.msra.mxu0 %v681
    %708 = vmatmul.f32.gmra.mxu0 %v687
    %v709 = vpop.f32.mrf.mxu0
    %v710 = vadd.f32 %v685, %v709
    %711 = vmatmul.f32.gmra.mxu0 %v690
    %v712 = vpop.f32.mrf.mxu0
    %v713 = vadd.f32 %v685, %v712
    %714 = vdwg.mxu0
    %v715 = vadd.f32 %v60, %v710
    %v716 = vadd.f32 %v61, %v713
    %v717 = vsel %vm70, %v715, 0.0
    %718 = vadd.xlane.f32.xlu0 %v717
    %v719 = vpop.xlane.xlu0 %718
    %v720 = vsel %vm70, %v716, 0.0
    %721 = vadd.xlane.f32.xlu0 %v720
    %v722 = vpop.xlane.xlu0 %721
    %v723 = vrcp.pop 32.0
    %v724 = vmul.f32 32.0, %v723
    %v725 = vsub.f32 1.0, %v724
    %v726 = vmul.f32 %v723, %v725
    %v727 = vadd.f32 %v723, %v726
    %vm728 = vweird.f32 %v723
    %v729 = vsel %vm728, %v723, %v727
    %v730 = vmul.f32 %v719, %v729
    %v731 = vmul.f32 %v722, %v729
    %v732 = vsub.f32 %v715, %v730
    %v733 = vsub.f32 %v716, %v731
    %v734 = vmul.f32 %v732, %v732
    %v735 = vmul.f32 %v733, %v733
    %v736 = vsel %vm70, %v734, 0.0
    %737 = vadd.xlane.f32.xlu0 %v736
    %v738 = vpop.xlane.xlu0 %737
    %v739 = vsel %vm70, %v735, 0.0
    %740 = vadd.xlane.f32.xlu0 %v739
    %v741 = vpop.xlane.xlu0 %740
    %v742 = vmul.f32 %v738, %v729
    %v743 = vmul.f32 %v741, %v729
    %v744 = vadd.f32 %v742, 1e-05
    %v745 = vadd.f32 %v743, 1e-05
    %v746 = vrsqrt.pop %v744
    %v747 = vmul.f32 %v746, %v744
    %v748 = vmul.f32 %v747, %v746
    %v749 = vmul.f32 0.5, %v748
    %v750 = vsub.f32 1.5, %v749
    %v751 = vmul.f32 %v746, %v750
    %vm752 = vweird.f32 %v744
    %vm753 = vweird.f32 %v746
    %vm754 = vmor %vm752, %vm753
    %v755 = vsel %vm754, %v746, %v751
    %v756 = vrsqrt.pop %v745
    %v757 = vmul.f32 %v756, %v745
    %v758 = vmul.f32 %v757, %v756
    %v759 = vmul.f32 0.5, %v758
    %v760 = vsub.f32 1.5, %v759
    %v761 = vmul.f32 %v756, %v760
    %vm762 = vweird.f32 %v745
    %vm763 = vweird.f32 %v756
    %vm764 = vmor %vm762, %vm763
    %v765 = vsel %vm764, %v756, %v761
    %v766 = vmul.f32 %v732, %v755
    %v767 = vmul.f32 %v733, %v765
    %v768 = vperm.slane %v674, 0
    %v769 = vmul.f32 %v766, %v768
    %v770 = vmul.f32 %v767, %v768
    %v771 = vperm.slane %v675, 0
    %v772 = vadd.f32 %v769, %v771
    %v773 = vadd.f32 %v770, %v771
    %v774 = vld [vmem:[%s4] sm:$0xff]
    %v775 = vld [vmem:[%s4 + $0x8] sm:$0xff]
    %v776 = vld [vmem:[%s4 + $0x10] sm:$0xff]
    %v777 = vld [vmem:[%s4 + $0x18] sm:$0xff]
    %v778 = vld [vmem:[%s5] sm:$0x1]
    %v780 = vperm.slane %v778, 0
    %v783 = vsel %vm70, %v772, 0
    %v786 = vsel %vm70, %v773, 0
    %788 = vmatpush.msra.mxu0 0.0
    %789 = vmatpush.msra.mxu0 0.0
    %790 = vmatpush.msra.mxu0 0.0
    %791 = vmatpush.msra.mxu0 0.0
    %792 = vmatpush.msra.mxu0 0.0
    %793 = vmatpush.msra.mxu0 0.0
    %794 = vmatpush.msra.mxu0 0.0
    %795 = vmatpush.msra.mxu0 0.0
    %796 = vmatpush.msra.mxu0 0.0
    %797 = vmatpush.msra.mxu0 0.0
    %798 = vmatpush.msra.mxu0 0.0
    %799 = vmatpush.msra.mxu0 0.0
    %800 = vmatpush.msra.mxu0 %v777
    %801 = vmatpush.msra.mxu0 %v776
    %802 = vmatpush.msra.mxu0 %v775
    %803 = vmatpush.msra.mxu0 %v774
    %804 = vmatmul.f32.gmra.mxu0 %v783
    %v805 = vpop.f32.mrf.mxu0
    %v806 = vadd.f32 %v780, %v805
    %807 = vmatmul.f32.gmra.mxu0 %v786
    %v808 = vpop.f32.mrf.mxu0
    %v809 = vadd.f32 %v780, %v808
    %810 = vdwg.mxu0
    %v811 = vmax.f32 %v806, 0.0
    %v812 = vmax.f32 %v809, 0.0
    %v813 = vld [vmem:[%s6] sm:$0xff]
    %v814 = vld [vmem:[%s6 + $0x8] sm:$0xff]
    %v815 = vld [vmem:[%s6 + $0x10] sm:$0xff]
    %v816 = vld [vmem:[%s6 + $0x18] sm:$0xff]
    %v817 = vld [vmem:[%s6 + $0x20] sm:$0xff]
    %v818 = vld [vmem:[%s6 + $0x28] sm:$0xff]
    %v819 = vld [vmem:[%s6 + $0x30] sm:$0xff]
    %v820 = vld [vmem:[%s6 + $0x38] sm:$0xff]
    %v821 = vperm.slane %v676, 0
    %vm822 = vcmask 523264
    %v824 = vsel %vm822, %v811, 0
    %v827 = vsel %vm822, %v812, 0
    %829 = vmatpush.msra.mxu0 0.0
    %830 = vmatpush.msra.mxu0 0.0
    %831 = vmatpush.msra.mxu0 0.0
    %832 = vmatpush.msra.mxu0 0.0
    %833 = vmatpush.msra.mxu0 0.0
    %834 = vmatpush.msra.mxu0 0.0
    %835 = vmatpush.msra.mxu0 0.0
    %836 = vmatpush.msra.mxu0 0.0
    %837 = vmatpush.msra.mxu0 %v820
    %838 = vmatpush.msra.mxu0 %v819
    %839 = vmatpush.msra.mxu0 %v818
    %840 = vmatpush.msra.mxu0 %v817
    %841 = vmatpush.msra.mxu0 %v816
    %842 = vmatpush.msra.mxu0 %v815
    %843 = vmatpush.msra.mxu0 %v814
    %844 = vmatpush.msra.mxu0 %v813
    %845 = vmatmul.f32.gmra.mxu0 %v824
    %v846 = vpop.f32.mrf.mxu0
    %v847 = vadd.f32 %v821, %v846
    %848 = vmatmul.f32.gmra.mxu0 %v827
    %v849 = vpop.f32.mrf.mxu0
    %v850 = vadd.f32 %v821, %v849
    %851 = vdwg.mxu0
    %v852 = vadd.f32 %v772, %v847
    %v853 = vadd.f32 %v773, %v850
    %v854 = vsel %vm70, %v852, 0.0
    %855 = vadd.xlane.f32.xlu0 %v854
    %v856 = vpop.xlane.xlu0 %855
    %v857 = vsel %vm70, %v853, 0.0
    %858 = vadd.xlane.f32.xlu0 %v857
    %v859 = vpop.xlane.xlu0 %858
    %v860 = vmul.f32 %v856, %v729
    %v861 = vmul.f32 %v859, %v729
    %v862 = vsub.f32 %v852, %v860
    %v863 = vsub.f32 %v853, %v861
    %v864 = vmul.f32 %v862, %v862
    %v865 = vmul.f32 %v863, %v863
    %v866 = vsel %vm70, %v864, 0.0
    %867 = vadd.xlane.f32.xlu0 %v866
    %v868 = vpop.xlane.xlu0 %867
    %v869 = vsel %vm70, %v865, 0.0
    %870 = vadd.xlane.f32.xlu0 %v869
    %v871 = vpop.xlane.xlu0 %870
    %v872 = vmul.f32 %v868, %v729
    %v873 = vmul.f32 %v871, %v729
    %v874 = vadd.f32 %v872, 1e-05
    %v875 = vadd.f32 %v873, 1e-05
    %v876 = vrsqrt.pop %v874
    %v877 = vmul.f32 %v876, %v874
    %v878 = vmul.f32 %v877, %v876
    %v879 = vmul.f32 0.5, %v878
    %v880 = vsub.f32 1.5, %v879
    %v881 = vmul.f32 %v876, %v880
    %vm882 = vweird.f32 %v874
    %vm883 = vweird.f32 %v876
    %vm884 = vmor %vm882, %vm883
    %v885 = vsel %vm884, %v876, %v881
    %v886 = vrsqrt.pop %v875
    %v887 = vmul.f32 %v886, %v875
    %v888 = vmul.f32 %v887, %v886
    %v889 = vmul.f32 0.5, %v888
    %v890 = vsub.f32 1.5, %v889
    %v891 = vmul.f32 %v886, %v890
    %vm892 = vweird.f32 %v875
    %vm893 = vweird.f32 %v886
    %vm894 = vmor %vm892, %vm893
    %v895 = vsel %vm894, %v886, %v891
    %v896 = vmul.f32 %v862, %v885
    %v897 = vmul.f32 %v863, %v895
    %v898 = vperm.slane %v677, 0
    %v899 = vmul.f32 %v896, %v898
    %v900 = vmul.f32 %v897, %v898
    %v901 = vperm.slane %v678, 0
    %v902 = vadd.f32 %v899, %v901
    %v903 = vadd.f32 %v900, %v901
    %904 = vst.msk [vmem:[#allocation8] sm:$0xff] %vm70, %v902
    %905 = vst.msk [vmem:[#allocation8 + $0x8] sm:$0xff] %vm70, %v903
    // Predicated region
    $region42: #{tpu_custom_call.1} parent=1 // pred_check
      _
    $region43: #{tpu_custom_call.1} parent=1 // pred_check_branch
      %907 = sbr.rel (0) target = $region45
    $region44: #{tpu_custom_call.1} parent=1 // pred_region
      %909 = vsyncadd [#allocation5], 0
      %s910 = sshll.u32 [#allocation8], 4
      %s911 = int_to_ptr.vmem [resolvable:$true] %s910
      %s912 = sshll.u32 %s8, 4
      %s913 = int_to_ptr.hbm [resolvable:$true] %s912
      %918 = dma.vmem_to_hbm [thread:$0]  %s911, 256, %s913, [#allocation5], 128, 128, 8
    $region45: #{tpu_custom_call.1} parent=1 // pred_fallthru
      _
    // Predicated region
    $region46: #{tpu_custom_call.1} parent=1 // pred_check
      _
    $region47: #{tpu_custom_call.1} parent=1 // pred_check_branch
      %920 = sbr.rel (0) target = $region49
    $region48: #{tpu_custom_call.1} parent=1 // pred_region
      %922 = dma.done [#allocation5], 256
    $region49: #{tpu_custom_call.1} parent=1 // pred_fallthru
      _
    %923 = vsyncpa [#allocation4], 1
    %924 = vsyncpa [#allocation7], 1
    %925 = vsyncpa [#allocation5], 1

</llo_original>
